<compile_context>
chip_gen: v7x
topology: tpu7x:2x2x1
jax: 0.10.0
libtpu: 0.0.40
codegen_flags: <defaults>
</compile_context>

<pallas_src>
import jax
import jax.numpy as jnp
from jax.experimental import pallas as pl
from jax.experimental.pallas import tpu as pltpu


def _l2norm2d_kernel(scale_ref, x_ref, o_ref):
    # scale_ref: (1,) scalar-prefetch value in SMEM.
    # x_ref / o_ref: (Bn, C, T_HW) tile; the channel reduction is axis=1 and is
    # per-(batch-row, lane) independent, so partial (masked) tiles are safe.
    x = x_ref[...]
    xf = x.astype(jnp.float32)
    ss = jnp.sum(xf * xf, axis=1, keepdims=True)                  # (Bn, 1, T_HW) f32
    inv = scale_ref[0] * jax.lax.rsqrt(jnp.maximum(ss, 1e-12))    # scale folded in
    o_ref[...] = x * inv.astype(x.dtype)                          # multiply in input dtype


_MIN_TILE_BYTES = 512 * 1024       # below this, the ~0.35us/step overhead dominates
_TARGET_TILE_BYTES = 1024 * 1024   # ~1 MiB DMAs: near roofline on v5e/v6e/v7x,
                                   # double-buffers everywhere, >=2 steps at N=1


def _choose_tiles(N, C, hw, itemsize):
    """Return (Bn, T_HW) block sizes for the (N, C, HW) view."""
    per_image_bytes = C * hw * itemsize
    if per_image_bytes < _MIN_TILE_BYTES:
        # Small slab per image: block several batch rows, full HW extent.
        # (A full-extent last dim is always a legal block size, even if it is
        #  not a multiple of 128.)
        bn = _MIN_TILE_BYTES // max(per_image_bytes, 1)
        bn = max(1, min(bn, N))
        return bn, hw
    # Large slab per image (e.g. SSD C=512, HW=1444): one image per block and
    # chunk the lane (HW) axis into 128-multiples targeting ~1 MiB per DMA.
    col_bytes = C * itemsize
    groups = max(1, _TARGET_TILE_BYTES // (128 * col_bytes))
    t_hw = int(groups) * 128
    if t_hw >= hw:
        t_hw = hw
    return 1, t_hw


def l2norm2d(x, scale):
    """x: (N, C, H, W). Returns scale * x * rsqrt(clamp(sum_c x^2, 1e-12))."""
    N, C, H, W = x.shape
    hw = H * W
    x3 = x.reshape(N, C, hw)
    itemsize = jnp.dtype(x.dtype).itemsize
    bn, t_hw = _choose_tiles(N, C, hw, itemsize)

    scale_arr = jnp.asarray([scale], dtype=jnp.float32)

    out = pl.pallas_call(
        _l2norm2d_kernel,
        out_shape=jax.ShapeDtypeStruct((N, C, hw), x.dtype),
        grid_spec=pltpu.PrefetchScalarGridSpec(
            num_scalar_prefetch=1,
            grid=(pl.cdiv(N, bn), pl.cdiv(hw, t_hw)),
            # index_maps receive the scalar-prefetch ref as a trailing arg.
            in_specs=[pl.BlockSpec((bn, C, t_hw), lambda n, t, s: (n, 0, t))],
            out_specs=pl.BlockSpec((bn, C, t_hw), lambda n, t, s: (n, 0, t)),
        ),
        compiler_params=pltpu.CompilerParams(
            dimension_semantics=("parallel", "parallel"),
            # Working set (2x in + 2x out buffers + f32 temps) stays at a few
            # MiB with ~1 MiB tiles; 32 MiB gives headroom on v5e (16 MiB
            # scoped default) and is within v7x's 64 MiB physical VMEM.
            vmem_limit_bytes=32 * 1024 * 1024,
        ),
    )(scale_arr, x3)

    return out.reshape(N, C, H, W)


def _reference(x, scale):
    xf = x.astype(jnp.float32)
    ss = jnp.sum(xf * xf, axis=1, keepdims=True)
    return (scale * xf * jax.lax.rsqrt(jnp.maximum(ss, 1e-12))).astype(x.dtype)


if __name__ == "__main__":
    scale = 20.0  # L2Norm2d(scale): scale is the module's only "parameter".
    key = jax.random.PRNGKey(0)
    k1, k2 = jax.random.split(key)

    # Primary check: small module-sized input.
    N, C, H, W = 2, 4, 16, 16
    x = jax.random.normal(k1, (N, C, H, W), dtype=jnp.float32)
    out = jax.block_until_ready(l2norm2d(x, scale))
    ref = _reference(x, scale)
    assert out.shape == (N, C, H, W)
    assert jnp.allclose(out, ref, atol=1e-4, rtol=1e-5)

    # Secondary check: HW = 19*19 = 361 (not a multiple of 128) and N = 3,
    # exercising the full-extent-lane / batched-row blocking path.
    x2 = jax.random.normal(k2, (3, 16, 19, 19), dtype=jnp.float32)
    out2 = jax.block_until_ready(l2norm2d(x2, scale))
    ref2 = _reference(x2, scale)
    assert out2.shape == (3, 16, 19, 19)
    assert jnp.allclose(out2, ref2, atol=1e-4, rtol=1e-5)

    print("KERNEL_OK")
</pallas_src>

<mosaic_0001>
module attributes {stable_mosaic.version = 11 : i64} {
  func.func @_l2norm2d_kernel(%arg0: i32, %arg1: i32, %arg2: memref<1xf32, #tpu.memory_space<smem>>, %arg3: memref<2x4x256xf32, #tpu.memory_space<vmem>>, %arg4: memref<2x4x256xf32, #tpu.memory_space<vmem>>) attributes {dimension_semantics = [#tpu.dimension_semantics<parallel>, #tpu.dimension_semantics<parallel>], iteration_bounds = array<i64: 1, 1>, scalar_prefetch = 1 : i64, scratch_operands = 0 : i64, tpu.core_type = #tpu.core_type<tc>, window_params = [{transform_indices = @transform_0, window_bounds = array<i64: 2, 4, 256>}, {transform_indices = @transform_1, window_bounds = array<i64: 2, 4, 256>}]} {
    %c0 = arith.constant 0 : index
    %c0_0 = arith.constant 0 : index
    %c0_1 = arith.constant 0 : index
    %0 = vector.load %arg3[%c0, %c0_0, %c0_1] : memref<2x4x256xf32, #tpu.memory_space<vmem>>, vector<2x4x256xf32>
    %1 = arith.mulf %0, %0 : vector<2x4x256xf32>
    %cst = arith.constant dense<0.000000e+00> : vector<2x256xf32>
    %2 = vector.multi_reduction <add>, %1, %cst [1] : vector<2x4x256xf32> to vector<2x256xf32>
    %3 = vector.shape_cast %2 : vector<2x256xf32> to vector<2x1x256xf32>
    %c0_2 = arith.constant 0 : index
    %4 = memref.load %arg2[%c0_2] : memref<1xf32, #tpu.memory_space<smem>>
    %cst_3 = arith.constant 9.99999996E-13 : f32
    %5 = vector.broadcast %cst_3 : f32 to vector<2x1x256xf32>
    %6 = arith.maximumf %3, %5 : vector<2x1x256xf32>
    %7 = math.rsqrt %6 : vector<2x1x256xf32>
    %8 = vector.broadcast %4 : f32 to vector<2x1x256xf32>
    %9 = arith.mulf %8, %7 : vector<2x1x256xf32>
    %10 = vector.broadcast %9 : vector<2x1x256xf32> to vector<2x4x256xf32>
    %11 = arith.mulf %0, %10 : vector<2x4x256xf32>
    %c0_4 = arith.constant 0 : index
    %c0_5 = arith.constant 0 : index
    %c0_6 = arith.constant 0 : index
    %12 = vector.load %arg4[%c0_4, %c0_5, %c0_6] : memref<2x4x256xf32, #tpu.memory_space<vmem>>, vector<2x4x256xf32>
    tpu.vector_store %arg4[%c0_4, %c0_5, %c0_6], %11 {strides = array<i32>} : memref<2x4x256xf32, #tpu.memory_space<vmem>>, vector<2x4x256xf32>,
    return
  }
  func.func @transform_0(%arg0: i32, %arg1: i32, %arg2: memref<1xf32, #tpu.memory_space<smem>>) -> (i32, i32, i32) {
    %c0_i32 = arith.constant 0 : i32
    %c0_i32_0 = arith.constant 0 : i32
    return %arg0, %c0_i32, %arg1 : i32, i32, i32
  }
  func.func @transform_1(%arg0: i32, %arg1: i32, %arg2: memref<1xf32, #tpu.memory_space<smem>>) -> (i32, i32, i32) {
    %c0_i32 = arith.constant 0 : i32
    %c0_i32_0 = arith.constant 0 : i32
    return %arg0, %c0_i32, %arg1 : i32, i32, i32
  }
}

</mosaic_0001>

<llo_original>
// kernel: tpu_custom_call.1
$region0: #{tpu_custom_call.1}
  #allocation0 [shape = 'u32[]', space=smem, size = 0x4, offset = 0x4, fixed_abs, tag = 'smem constant byte address 0x4 - core index']
  #allocation1 [shape = 'u32[144,128]{1,0:T(1,128)}', space=vmem, size = 0x12000, scoped, tag = 'internal scratch']
  #allocation2 [shape = 's32[1]{0}', space=sflag, size = 0x4, scoped, tag = 'scoped memory for tpu_custom_call.1']
  #allocation3 [shape = 'f32[1]{0:T(128)S(6)}', space=smem, size = 0x200, scoped, tag = 'prefetched SMEM operand 0']
  %s0 = inlined_call_operand.<no memory space> [shape: f32[1], index: 0, kind: input, shape index: {}]
  %s1 = inlined_call_operand.hbm [shape: f32[2,4,256], index: 1, kind: input, shape index: {}]
  %s2 = inlined_call_operand.hbm [shape: f32[2,4,256], index: 2, kind: output, shape index: {}]
  %s3 = sld [smem:[#allocation0]]
  $region18: #{tpu_custom_call.1} parent=0
    _
  %s5 = ssub.s32 1, %s3
  %s6 = scalar_select 0, %s5, %s3
  %7 = sst [smem:[#allocation3]] %s0
  $region1: #{tpu_custom_call.1} parent=0
    #allocation4 [shape = 'u8[8192]{0}', space=vmem, size = 0x2000, scoped, tag = 'input window, operand 1, single buffered']
    #allocation5 [shape = 's32[1]{0}', space=sflag, size = 0x4, scoped, tag = 'scoped memory for tpu_custom_call.1']
    #allocation6 [shape = 's32[1]{0}', space=sflag, size = 0x4, scoped, tag = 'scoped memory for tpu_custom_call.1']
    #allocation7 [shape = 'u8[8192]{0}', space=vmem, size = 0x2000, scoped, tag = 'output window, operand 0, single buffered']
    %8 = vsyncpa [#allocation5], 0
    %9 = vsyncpa [#allocation6], 0
    // Predicated region
    $region2: #{tpu_custom_call.1} parent=1 // pred_check
      _
    $region3: #{tpu_custom_call.1} parent=1 // pred_check_branch
      %11 = sbr.rel (0) target = $region5
    $region4: #{tpu_custom_call.1} parent=1 // pred_region
      %s13 = ssub.s32 256, 256
      %14 = vsyncadd [#allocation5], %s13
      %s15 = sshll.u32 [#allocation4], 4
      %s16 = int_to_ptr.vmem [resolvable:$true] %s15
      %21 = dma.hbm_to_vmem [thread:$0]  %s1, 256, %s16, [#allocation5], 128, 128, 8
    $region5: #{tpu_custom_call.1} parent=1 // pred_fallthru
      _
    // Predicated region
    $region6: #{tpu_custom_call.1} parent=1 // pred_check
      _
    $region7: #{tpu_custom_call.1} parent=1 // pred_check_branch
      %23 = sbr.rel (0) target = $region9
    $region8: #{tpu_custom_call.1} parent=1 // pred_region
      %24 = dma.done [#allocation5], 256
    $region9: #{tpu_custom_call.1} parent=1 // pred_fallthru
      _
    %v25 = vld [vmem:[#allocation4] sm:$0xff]
    %v26 = vld [vmem:[#allocation4 + $0x8] sm:$0xff]
    %v27 = vmul.f32 %v25, %v25
    %v28 = vmul.f32 %v26, %v26
    %v31 = vcombine.high %v27, %v27
    %v32 = vcombine.high %v28, %v28
    %vm35 = vcmask 1043456
    %v36 = vsel %vm35, %v27, 0.0
    %v37 = vrot.slane %v36, 4
    %v38 = vadd.f32 %v36, %v37
    %v39 = vrot.slane %v38, 2
    %v40 = vadd.f32 %v38, %v39
    %v41 = vrot.slane %v40, 1
    %v42 = vadd.f32 %v40, %v41
    %v43 = vsel %vm35, %v31, 0.0
    %v44 = vrot.slane %v43, 4
    %v45 = vadd.f32 %v43, %v44
    %v46 = vrot.slane %v45, 2
    %v47 = vadd.f32 %v45, %v46
    %v48 = vrot.slane %v47, 1
    %v49 = vadd.f32 %v47, %v48
    %v50 = vsel %vm35, %v28, 0.0
    %v51 = vrot.slane %v50, 4
    %v52 = vadd.f32 %v50, %v51
    %v53 = vrot.slane %v52, 2
    %v54 = vadd.f32 %v52, %v53
    %v55 = vrot.slane %v54, 1
    %v56 = vadd.f32 %v54, %v55
    %v57 = vsel %vm35, %v32, 0.0
    %v58 = vrot.slane %v57, 4
    %v59 = vadd.f32 %v57, %v58
    %v60 = vrot.slane %v59, 2
    %v61 = vadd.f32 %v59, %v60
    %v62 = vrot.slane %v61, 1
    %v63 = vadd.f32 %v61, %v62
    %s64 = sld [smem:[#allocation3]]
    %v65 = vmax.f32 %v42, 1e-12
    %v66 = vmax.f32 %v49, 1e-12
    %v67 = vmax.f32 %v56, 1e-12
    %v68 = vmax.f32 %v63, 1e-12
    %v69 = vrsqrt.pop %v65
    %v70 = vrsqrt.pop %v66
    %v71 = vrsqrt.pop %v67
    %v72 = vrsqrt.pop %v68
    %v73 = vstv %s64
    %v74 = vmul.f32 %v73, %v69
    %v75 = vmul.f32 %v73, %v70
    %v76 = vmul.f32 %v73, %v71
    %v77 = vmul.f32 %v73, %v72
    %v82 = vcombine.low %v74, %v75
    %v83 = vcombine.low %v76, %v77
    %v86 = vmul.f32 %v25, %v82
    %v87 = vmul.f32 %v26, %v83
    %88 = vst [vmem:[#allocation7] sm:$0xff] %v86
    %89 = vst [vmem:[#allocation7 + $0x8] sm:$0xff] %v87
    // Predicated region
    $region10: #{tpu_custom_call.1} parent=1 // pred_check
      _
    $region11: #{tpu_custom_call.1} parent=1 // pred_check_branch
      %91 = sbr.rel (0) target = $region13
    $region12: #{tpu_custom_call.1} parent=1 // pred_region
      %s93 = ssub.s32 256, 256
      %94 = vsyncadd [#allocation6], %s93
      %s95 = sshll.u32 [#allocation7], 4
      %s96 = int_to_ptr.vmem [resolvable:$true] %s95
      %101 = dma.vmem_to_hbm [thread:$0]  %s96, 256, %s2, [#allocation6], 128, 128, 8
    $region13: #{tpu_custom_call.1} parent=1 // pred_fallthru
      _
    // Predicated region
    $region14: #{tpu_custom_call.1} parent=1 // pred_check
      _
    $region15: #{tpu_custom_call.1} parent=1 // pred_check_branch
      %103 = sbr.rel (0) target = $region17
    $region16: #{tpu_custom_call.1} parent=1 // pred_region
      %104 = dma.done [#allocation6], 256
    $region17: #{tpu_custom_call.1} parent=1 // pred_fallthru
      _
    %105 = vsyncpa [#allocation5], 1
    %106 = vsyncpa [#allocation6], 1

</llo_original>
